<compile_context>
chip_gen: v7x
topology: tpu7x:2x2x1
jax: 0.10.0
libtpu: 0.0.40
codegen_flags: <defaults>
</compile_context>

<pallas_src>
import jax
import jax.numpy as jnp
from jax.experimental import pallas as pl
from jax.experimental.pallas import tpu as pltpu


_SQRT_HALF = 0.7071067811865476


def _gelu_erf(h):
    # Exact erf GELU in f32, matching torch.nn.GELU() default.
    # TODO(synk): tanh-approx GELU (EUP slot) is cheaper on v6e/v7x when the
    # kernel is not fully MXU-bound, but does not bit-match torch's default.
    return 0.5 * h * (1.0 + jax.lax.erf(h * jnp.float32(_SQRT_HALF)))


def mlp_fused_kernel(x_ref, w1_ref, b1_ref, w2_ref, b2_ref, o_ref):
    # Full-F-resident path.  grid = (M_tiles,)
    # x (TM, Hp)  w1 (Hp, F)  b1 (1, F)  w2 (F, Hp)  b2 (1, Hp)  o (TM, Hp)
    h = jnp.dot(x_ref[...], w1_ref[...], preferred_element_type=jnp.float32)
    h = _gelu_erf(h + b1_ref[...].astype(jnp.float32))
    y = jnp.dot(h.astype(w2_ref.dtype), w2_ref[...],
                preferred_element_type=jnp.float32)
    o_ref[...] = (y + b2_ref[...].astype(jnp.float32)).astype(o_ref.dtype)


def mlp_tiled_kernel(x_ref, w1_ref, b1_ref, w2_ref, b2_ref, o_ref, acc_ref):
    # F-tiled reduction path.  grid = (M_tiles, F_tiles)
    # x (TM, Hp)  w1 (Hp, TF)  b1 (1, TF)  w2 (TF, Hp)  b2 (1, Hp)
    # acc_ref (TM, Hp) f32 accumulates the second matmul over F tiles.
    f = pl.program_id(1)

    h = jnp.dot(x_ref[...], w1_ref[...], preferred_element_type=jnp.float32)
    h = _gelu_erf(h + b1_ref[...].astype(jnp.float32))
    partial = jnp.dot(h.astype(w2_ref.dtype), w2_ref[...],
                      preferred_element_type=jnp.float32)

    @pl.when(f == 0)
    def _first():                    # write directly; no zero-fill of acc
        acc_ref[...] = partial

    @pl.when(f > 0)
    def _accumulate():
        acc_ref[...] += partial

    @pl.when(f == pl.num_programs(1) - 1)
    def _finalize():
        y = acc_ref[...] + b2_ref[...].astype(jnp.float32)
        o_ref[...] = y.astype(o_ref.dtype)


def _round_up(x, m):
    return ((x + m - 1) // m) * m


def _round_down(x, m):
    return (x // m) * m


def _vmem_budget_bytes():
    """~85% of per-core VMEM: ~109 MiB on v5e/v6e, ~54 MiB on v7x."""
    try:
        cap = int(pltpu.get_tpu_info().vmem_capacity_bytes)
    except Exception:
        cap = 64 * 1024 * 1024       # conservative fallback (v7x per-TC VMEM)
    return int(cap * 0.85)


def _plan_tiles(M, Hp, F, x_bytes, w_bytes, budget):
    """Pick (mode, tm, tf).  mode == 'fused' => weights fully VMEM-resident."""
    pack = 16 if x_bytes < 4 else 8            # sublane multiple for M tiles

    tm_max = min(1024, _round_up(M, pack))
    if M >= 4 * pack:
        # keep >= 2 tiles on the 'parallel' axis so both v7x TCs are busy
        tm_max = min(tm_max, _round_up(pl.cdiv(M, 2), pack))

    if M < pack:
        tms = [M]                              # full dim: (8,128) rule exempt
    else:
        tms = list(range(tm_max, pack - 1, -pack))

    # --- Path A: full-F weight residency (weights single-buffered). ---
    w_resident = (2 * Hp * F + F + Hp) * w_bytes
    if w_resident <= budget:
        for tm in tms:
            foot = (w_resident
                    + 4 * tm * Hp * x_bytes    # x + out, double-buffered
                    + 2 * tm * F * 4)          # (TM,F) f32 h intermediate + cast
            if foot <= budget:
                return "fused", tm, F

    # --- Path B: tile F (reduction).  Weights are re-streamed per M tile, so
    # prefer a large TM to keep arithmetic intensity above the HBM roofline. ---
    fallback = None
    for tm in tms:
        fixed = 2 * Hp * w_bytes + 4 * tm * Hp * x_bytes + tm * Hp * 4
        per_tf = (4 * Hp + 2) * w_bytes + 8 * tm
        tf = _round_down(max(0, (budget - fixed)) // per_tf, 128)
        tf = min(tf, _round_up(F, 128))
        if tf >= 128:
            if fallback is None:
                fallback = ("tiled", tm, int(tf))
            if tf >= min(2048, _round_up(F, 128)):
                return "tiled", tm, int(tf)
    if fallback is not None:
        return fallback
    return "tiled", pack, 128                  # last resort: smallest tiles


def mlp_block(x, w1, b1, w2, b2, *, tm=None, tf=None, compute_dtype=None):
    """x: (B, S, H) -> (B, S, H).  w1: (H, F), b1: (F,), w2: (F, H), b2: (H,)."""
    B, S, H = x.shape
    F = w1.shape[1]
    M = B * S
    out_dtype = x.dtype

    # Optional low-precision compute (accumulation stays f32 in-kernel).
    if compute_dtype is not None:
        x = x.astype(compute_dtype)
        w1 = w1.astype(compute_dtype)
        w2 = w2.astype(compute_dtype)
    x_bytes = jnp.dtype(x.dtype).itemsize
    w_bytes = jnp.dtype(w1.dtype).itemsize
    pack = 16 if x_bytes < 4 else 8

    # Lane-dense output: pad H to a multiple of 128 (padded cols are exact
    # zeros: zero w1 rows / w2 cols / b2 entries), sliced off after the call.
    Hp = _round_up(H, 128)
    x2d = x.reshape(M, H)
    if Hp != H:
        x2d = jnp.pad(x2d, ((0, 0), (0, Hp - H)))
        w1 = jnp.pad(w1, ((0, Hp - H), (0, 0)))
        w2 = jnp.pad(w2, ((0, 0), (0, Hp - H)))
        b2 = jnp.pad(b2, (0, Hp - H))
    b2_2d = b2.reshape(1, Hp)

    budget = _vmem_budget_bytes()
    plan_mode, plan_tm, plan_tf = _plan_tiles(M, Hp, F, x_bytes, w_bytes, budget)

    if tf is None:
        mode, tf_eff = plan_mode, plan_tf
    else:
        tf_eff = min(_round_up(tf, 128), _round_up(F, 128))
        mode = "fused" if tf_eff >= F else "tiled"
    if tm is None:
        tm_eff = plan_tm
    else:
        tm_eff = tm if tm == M else min(_round_up(tm, pack), _round_up(M, pack))

    nm = pl.cdiv(M, tm_eff)

    def call(single_buffer):
        def const_spec(shape, index_map):
            # Grid-constant block: a single pipeline buffer is enough.
            if single_buffer:
                try:
                    return pl.BlockSpec(shape, index_map,
                                        pipeline_mode=pl.Buffered(1))
                except Exception:
                    pass
            return pl.BlockSpec(shape, index_map)

        if mode == "fused":
            b1_2d = b1.reshape(1, F)
            return pl.pallas_call(
                mlp_fused_kernel,
                out_shape=jax.ShapeDtypeStruct((M, Hp), out_dtype),
                grid=(nm,),
                in_specs=[
                    pl.BlockSpec((tm_eff, Hp), lambda i: (i, 0)),   # x
                    const_spec((Hp, F), lambda i: (0, 0)),          # w1 resident
                    const_spec((1, F), lambda i: (0, 0)),           # b1 resident
                    const_spec((F, Hp), lambda i: (0, 0)),          # w2 resident
                    const_spec((1, Hp), lambda i: (0, 0)),          # b2 resident
                ],
                out_specs=pl.BlockSpec((tm_eff, Hp), lambda i: (i, 0)),
                compiler_params=pltpu.CompilerParams(
                    dimension_semantics=("parallel",),
                    vmem_limit_bytes=budget,
                ),
            )(x2d, w1, b1_2d, w2, b2_2d)

        # Tiled path: pad F so TF divides it exactly (zero cols/rows/bias
        # entries contribute exactly 0 to the accumulator).
        Fp = _round_up(F, tf_eff)
        w1p = jnp.pad(w1, ((0, 0), (0, Fp - F))) if Fp != F else w1
        w2p = jnp.pad(w2, ((0, Fp - F), (0, 0))) if Fp != F else w2
        b1p = jnp.pad(b1, (0, Fp - F)) if Fp != F else b1
        b1_2d = b1p.reshape(1, Fp)
        nf = Fp // tf_eff
        return pl.pallas_call(
            mlp_tiled_kernel,
            out_shape=jax.ShapeDtypeStruct((M, Hp), out_dtype),
            grid=(nm, nf),
            in_specs=[
                pl.BlockSpec((tm_eff, Hp), lambda i, f: (i, 0)),    # x
                pl.BlockSpec((Hp, tf_eff), lambda i, f: (0, f)),    # w1
                pl.BlockSpec((1, tf_eff), lambda i, f: (0, f)),     # b1
                pl.BlockSpec((tf_eff, Hp), lambda i, f: (f, 0)),    # w2
                const_spec((1, Hp), lambda i, f: (0, 0)),           # b2 constant
            ],
            out_specs=pl.BlockSpec((tm_eff, Hp), lambda i, f: (i, 0)),
            scratch_shapes=[pltpu.VMEM((tm_eff, Hp), jnp.float32)],
            compiler_params=pltpu.CompilerParams(
                dimension_semantics=("parallel", "arbitrary"),
                vmem_limit_bytes=budget,
            ),
        )(x2d, w1p, b1_2d, w2p, b2_2d)

    try:
        out2d = call(single_buffer=True)
    except Exception:
        # pl.Buffered(1) not supported by this build -> default buffering.
        out2d = call(single_buffer=False)

    if Hp != H:
        out2d = out2d[:, :H]
    return out2d.reshape(B, S, H)


def init_params(key, hidden_dim, mlp_dim, dtype=jnp.float32):
    """Deterministic synthetic init (shapes match the torch module)."""
    k1, k2, k3, k4 = jax.random.split(key, 4)
    bound1 = (6.0 / hidden_dim) ** 0.5
    bound2 = (6.0 / mlp_dim) ** 0.5
    w1 = jax.random.uniform(k1, (hidden_dim, mlp_dim), dtype, -bound1, bound1)
    b1 = jax.random.uniform(k2, (mlp_dim,), dtype, -0.01, 0.01)
    w2 = jax.random.uniform(k3, (mlp_dim, hidden_dim), dtype, -bound2, bound2)
    b2 = jax.random.uniform(k4, (hidden_dim,), dtype, -0.01, 0.01)
    return w1, b1, w2, b2


def _reference(x, w1, b1, w2, b2):
    B, S, H = x.shape
    h = x.reshape(-1, H) @ w1 + b1
    h = 0.5 * h * (1.0 + jax.lax.erf(h / jnp.sqrt(2.0)))
    return (h @ w2 + b2).reshape(B, S, H)


if __name__ == "__main__":
    key = jax.random.PRNGKey(0)

    # --- Test 1: small module-consistent shapes (fused / weight-resident path;
    #     H=32 gets lane-padded to 128). ---
    B, S, H, F = 2, 8, 32, 64
    kx, kp = jax.random.split(key)
    x = jax.random.normal(kx, (B, S, H), jnp.float32)
    w1, b1, w2, b2 = init_params(kp, H, F)

    out = jax.block_until_ready(mlp_block(x, w1, b1, w2, b2))
    ref = _reference(x, w1, b1, w2, b2)
    assert out.shape == ref.shape
    assert jnp.allclose(out, ref, atol=1e-5, rtol=1e-5), "mismatch (small/fused)"

    # --- Test 2: force the F-tiled reduction path (grid 4 x 2, f32 acc). ---
    B2, S2, H2, F2 = 2, 128, 128, 256
    kx2, kp2 = jax.random.split(jax.random.PRNGKey(1))
    x2 = jax.random.normal(kx2, (B2, S2, H2), jnp.float32)
    w1b, b1b, w2b, b2b = init_params(kp2, H2, F2)

    out2 = jax.block_until_ready(
        mlp_block(x2, w1b, b1b, w2b, b2b, tm=64, tf=128))
    ref2 = _reference(x2, w1b, b1b, w2b, b2b)
    assert jnp.allclose(out2, ref2, atol=1e-4, rtol=1e-4), "mismatch (tiled)"

    # --- Test 3: bf16 compute path (weights cast once in the wrapper, f32
    #     accumulation in-kernel); planner-chosen tiles, >=2 parallel M tiles. ---
    B3, S3, H3, F3 = 2, 256, 128, 512
    kx3, kp3 = jax.random.split(jax.random.PRNGKey(2))
    x3 = jax.random.normal(kx3, (B3, S3, H3), jnp.float32)
    w1c, b1c, w2c, b2c = init_params(kp3, H3, F3)

    out3 = jax.block_until_ready(
        mlp_block(x3, w1c, b1c, w2c, b2c, compute_dtype=jnp.bfloat16))
    ref3 = _reference(x3, w1c, b1c, w2c, b2c)
    assert jnp.allclose(out3, ref3, atol=1e-1, rtol=5e-2), "mismatch (bf16)"

    print("KERNEL_OK")
</pallas_src>

<mosaic_0001>
module attributes {stable_mosaic.version = 11 : i64} {
  func.func @mlp_fused_kernel(%arg0: i32, %arg1: memref<16x128xf32, #tpu.memory_space<vmem>>, %arg2: memref<128x64xf32, #tpu.memory_space<vmem>>, %arg3: memref<1x64xf32, #tpu.memory_space<vmem>>, %arg4: memref<64x128xf32, #tpu.memory_space<vmem>>, %arg5: memref<1x128xf32, #tpu.memory_space<vmem>>, %arg6: memref<16x128xf32, #tpu.memory_space<vmem>>) attributes {dimension_semantics = [#tpu.dimension_semantics<parallel>], iteration_bounds = array<i64: 1>, scalar_prefetch = 0 : i64, scratch_operands = 0 : i64, tpu.core_type = #tpu.core_type<tc>, window_params = [{transform_indices = @transform_0, window_bounds = array<i64: 16, 128>}, {pipeline_mode = #tpu.pipeline_mode<synchronous>, transform_indices = @transform_1, window_bounds = array<i64: 128, 64>}, {pipeline_mode = #tpu.pipeline_mode<synchronous>, transform_indices = @transform_2, window_bounds = array<i64: 1, 64>}, {pipeline_mode = #tpu.pipeline_mode<synchronous>, transform_indices = @transform_3, window_bounds = array<i64: 64, 128>}, {pipeline_mode = #tpu.pipeline_mode<synchronous>, transform_indices = @transform_4, window_bounds = array<i64: 1, 128>}, {transform_indices = @transform_5, window_bounds = array<i64: 16, 128>}]} {
    %c0 = arith.constant 0 : index
    %c0_0 = arith.constant 0 : index
    %0 = vector.load %arg1[%c0, %c0_0] : memref<16x128xf32, #tpu.memory_space<vmem>>, vector<16x128xf32>
    %c0_1 = arith.constant 0 : index
    %c0_2 = arith.constant 0 : index
    %1 = vector.load %arg2[%c0_1, %c0_2] : memref<128x64xf32, #tpu.memory_space<vmem>>, vector<128x64xf32>
    %cst = arith.constant dense<0.000000e+00> : vector<16x64xf32>
    %2 = tpu.matmul %0, %1, %cst {dimension_numbers = #tpu.dot_dimension_numbers<[1], [0], [0], [1], [0, 0, 1, 1], [], []>} : vector<16x128xf32>, vector<128x64xf32>, vector<16x64xf32> -> vector<16x64xf32>
    %c0_3 = arith.constant 0 : index
    %c0_4 = arith.constant 0 : index
    %3 = vector.load %arg3[%c0_3, %c0_4] : memref<1x64xf32, #tpu.memory_space<vmem>>, vector<1x64xf32>
    %4 = vector.broadcast %3 : vector<1x64xf32> to vector<16x64xf32>
    %5 = arith.addf %2, %4 : vector<16x64xf32>
    %cst_5 = arith.constant 5.000000e-01 : f32
    %6 = vector.broadcast %cst_5 : f32 to vector<16x64xf32>
    %7 = arith.mulf %6, %5 : vector<16x64xf32>
    %cst_6 = arith.constant 0.707106769 : f32
    %8 = vector.broadcast %cst_6 : f32 to vector<16x64xf32>
    %9 = arith.mulf %5, %8 : vector<16x64xf32>
    %10 = math.erf %9 : vector<16x64xf32>
    %cst_7 = arith.constant 1.000000e+00 : f32
    %11 = vector.broadcast %cst_7 : f32 to vector<16x64xf32>
    %12 = arith.addf %11, %10 : vector<16x64xf32>
    %13 = arith.mulf %7, %12 : vector<16x64xf32>
    %c0_8 = arith.constant 0 : index
    %c0_9 = arith.constant 0 : index
    %14 = vector.load %arg4[%c0_8, %c0_9] : memref<64x128xf32, #tpu.memory_space<vmem>>, vector<64x128xf32>
    %cst_10 = arith.constant dense<0.000000e+00> : vector<16x128xf32>
    %15 = tpu.matmul %13, %14, %cst_10 {dimension_numbers = #tpu.dot_dimension_numbers<[1], [0], [0], [1], [0, 0, 1, 1], [], []>} : vector<16x64xf32>, vector<64x128xf32>, vector<16x128xf32> -> vector<16x128xf32>
    %c0_11 = arith.constant 0 : index
    %c0_12 = arith.constant 0 : index
    %16 = vector.load %arg5[%c0_11, %c0_12] : memref<1x128xf32, #tpu.memory_space<vmem>>, vector<1x128xf32>
    %17 = vector.broadcast %16 : vector<1x128xf32> to vector<16x128xf32>
    %18 = arith.addf %15, %17 : vector<16x128xf32>
    %c0_13 = arith.constant 0 : index
    %c0_14 = arith.constant 0 : index
    %19 = vector.load %arg6[%c0_13, %c0_14] : memref<16x128xf32, #tpu.memory_space<vmem>>, vector<16x128xf32>
    tpu.vector_store %arg6[%c0_13, %c0_14], %18 {strides = array<i32>} : memref<16x128xf32, #tpu.memory_space<vmem>>, vector<16x128xf32>,
    return
  }
  func.func @transform_0(%arg0: i32) -> (i32, i32) {
    %c0_i32 = arith.constant 0 : i32
    %c0_i32_0 = arith.constant 0 : i32
    return %arg0, %c0_i32 : i32, i32
  }
  func.func @transform_1(%arg0: i32) -> (i32, i32) {
    %c0_i32 = arith.constant 0 : i32
    %c0_i32_0 = arith.constant 0 : i32
    %c0_i32_1 = arith.constant 0 : i32
    return %c0_i32, %c0_i32_0 : i32, i32
  }
  func.func @transform_2(%arg0: i32) -> (i32, i32) {
    %c0_i32 = arith.constant 0 : i32
    %c0_i32_0 = arith.constant 0 : i32
    %c0_i32_1 = arith.constant 0 : i32
    return %c0_i32, %c0_i32_0 : i32, i32
  }
  func.func @transform_3(%arg0: i32) -> (i32, i32) {
    %c0_i32 = arith.constant 0 : i32
    %c0_i32_0 = arith.constant 0 : i32
    %c0_i32_1 = arith.constant 0 : i32
    return %c0_i32, %c0_i32_0 : i32, i32
  }
  func.func @transform_4(%arg0: i32) -> (i32, i32) {
    %c0_i32 = arith.constant 0 : i32
    %c0_i32_0 = arith.constant 0 : i32
    %c0_i32_1 = arith.constant 0 : i32
    return %c0_i32, %c0_i32_0 : i32, i32
  }
  func.func @transform_5(%arg0: i32) -> (i32, i32) {
    %c0_i32 = arith.constant 0 : i32
    %c0_i32_0 = arith.constant 0 : i32
    return %arg0, %c0_i32 : i32, i32
  }
}

module attributes {stable_mosaic.version = 11 : i64} {
  func.func @mlp_fused_kernel(%arg0: i32, %arg1: memref<16x128xf32, #tpu.memory_space<vmem>>, %arg2: memref<128x64xf32, #tpu.memory_space<vmem>>, %arg3: memref<1x64xf32, #tpu.memory_space<vmem>>, %arg4: memref<64x128xf32, #tpu.memory_space<vmem>>, %arg5: memref<1x128xf32, #tpu.memory_space<vmem>>, %arg6: memref<16x128xf32, #tpu.memory_space<vmem>>) attributes {dimension_semantics = [#tpu.dimension_semantics<parallel>], iteration_bounds = array<i64: 1>, scalar_prefetch = 0 : i64, scratch_operands = 0 : i64, tpu.core_type = #tpu.core_type<tc>, window_params = [{transform_indices = @transform_0, window_bounds = array<i64: 16, 128>}, {pipeline_mode = #tpu.pipeline_mode<synchronous>, transform_indices = @transform_1, window_bounds = array<i64: 128, 64>}, {pipeline_mode = #tpu.pipeline_mode<synchronous>, transform_indices = @transform_2, window_bounds = array<i64: 1, 64>}, {pipeline_mode = #tpu.pipeline_mode<synchronous>, transform_indices = @transform_3, window_bounds = array<i64: 64, 128>}, {pipeline_mode = #tpu.pipeline_mode<synchronous>, transform_indices = @transform_4, window_bounds = array<i64: 1, 128>}, {transform_indices = @transform_5, window_bounds = array<i64: 16, 128>}]} {
    %c0 = arith.constant 0 : index
    %c0_0 = arith.constant 0 : index
    %0 = vector.load %arg1[%c0, %c0_0] : memref<16x128xf32, #tpu.memory_space<vmem>>, vector<16x128xf32>
    %c0_1 = arith.constant 0 : index
    %c0_2 = arith.constant 0 : index
    %1 = vector.load %arg2[%c0_1, %c0_2] : memref<128x64xf32, #tpu.memory_space<vmem>>, vector<128x64xf32>
    %cst = arith.constant dense<0.000000e+00> : vector<16x64xf32>
    %2 = tpu.matmul %0, %1, %cst {dimension_numbers = #tpu.dot_dimension_numbers<[1], [0], [0], [1], [0, 0, 1, 1], [], []>} : vector<16x128xf32>, vector<128x64xf32>, vector<16x64xf32> -> vector<16x64xf32>
    %c0_3 = arith.constant 0 : index
    %c0_4 = arith.constant 0 : index
    %3 = vector.load %arg3[%c0_3, %c0_4] : memref<1x64xf32, #tpu.memory_space<vmem>>, vector<1x64xf32>
    %4 = vector.broadcast %3 : vector<1x64xf32> to vector<16x64xf32>
    %5 = arith.addf %2, %4 : vector<16x64xf32>
    %cst_5 = arith.constant 5.000000e-01 : f32
    %6 = vector.broadcast %cst_5 : f32 to vector<16x64xf32>
    %7 = arith.mulf %6, %5 : vector<16x64xf32>
    %cst_6 = arith.constant 0.707106769 : f32
    %8 = vector.broadcast %cst_6 : f32 to vector<16x64xf32>
    %9 = arith.mulf %5, %8 : vector<16x64xf32>
    %10 = math.erf %9 : vector<16x64xf32>
    %cst_7 = arith.constant 1.000000e+00 : f32
    %11 = vector.broadcast %cst_7 : f32 to vector<16x64xf32>
    %12 = arith.addf %11, %10 : vector<16x64xf32>
    %13 = arith.mulf %7, %12 : vector<16x64xf32>
    %c0_8 = arith.constant 0 : index
    %c0_9 = arith.constant 0 : index
    %14 = vector.load %arg4[%c0_8, %c0_9] : memref<64x128xf32, #tpu.memory_space<vmem>>, vector<64x128xf32>
    %cst_10 = arith.constant dense<0.000000e+00> : vector<16x128xf32>
    %15 = tpu.matmul %13, %14, %cst_10 {dimension_numbers = #tpu.dot_dimension_numbers<[1], [0], [0], [1], [0, 0, 1, 1], [], []>} : vector<16x64xf32>, vector<64x128xf32>, vector<16x128xf32> -> vector<16x128xf32>
    %c0_11 = arith.constant 0 : index
    %c0_12 = arith.constant 0 : index
    %16 = vector.load %arg5[%c0_11, %c0_12] : memref<1x128xf32, #tpu.memory_space<vmem>>, vector<1x128xf32>
    %17 = vector.broadcast %16 : vector<1x128xf32> to vector<16x128xf32>
    %18 = arith.addf %15, %17 : vector<16x128xf32>
    %c0_13 = arith.constant 0 : index
    %c0_14 = arith.constant 0 : index
    %19 = vector.load %arg6[%c0_13, %c0_14] : memref<16x128xf32, #tpu.memory_space<vmem>>, vector<16x128xf32>
    tpu.vector_store %arg6[%c0_13, %c0_14], %18 {strides = array<i32>} : memref<16x128xf32, #tpu.memory_space<vmem>>, vector<16x128xf32>,
    return
  }
  func.func @transform_0(%arg0: i32) -> (i32, i32) {
    %c0_i32 = arith.constant 0 : i32
    %c0_i32_0 = arith.constant 0 : i32
    return %arg0, %c0_i32 : i32, i32
  }
  func.func @transform_1(%arg0: i32) -> (i32, i32) {
    %c0_i32 = arith.constant 0 : i32
    %c0_i32_0 = arith.constant 0 : i32
    %c0_i32_1 = arith.constant 0 : i32
    return %c0_i32, %c0_i32_0 : i32, i32
  }
  func.func @transform_2(%arg0: i32) -> (i32, i32) {
    %c0_i32 = arith.constant 0 : i32
    %c0_i32_0 = arith.constant 0 : i32
    %c0_i32_1 = arith.constant 0 : i32
    return %c0_i32, %c0_i32_0 : i32, i32
  }
  func.func @transform_3(%arg0: i32) -> (i32, i32) {
    %c0_i32 = arith.constant 0 : i32
    %c0_i32_0 = arith.constant 0 : i32
    %c0_i32_1 = arith.constant 0 : i32
    return %c0_i32, %c0_i32_0 : i32, i32
  }
  func.func @transform_4(%arg0: i32) -> (i32, i32) {
    %c0_i32 = arith.constant 0 : i32
    %c0_i32_0 = arith.constant 0 : i32
    %c0_i32_1 = arith.constant 0 : i32
    return %c0_i32, %c0_i32_0 : i32, i32
  }
  func.func @transform_5(%arg0: i32) -> (i32, i32) {
    %c0_i32 = arith.constant 0 : i32
    %c0_i32_0 = arith.constant 0 : i32
    return %arg0, %c0_i32 : i32, i32
  }
}

</mosaic_0001>

<llo_original>
// kernel: tpu_custom_call.1
$region0: #{tpu_custom_call.1}
  #allocation0 [shape = 'u32[]', space=smem, size = 0x4, offset = 0x4, fixed_abs, tag = 'smem constant byte address 0x4 - core index']
  #allocation1 [shape = 'u32[144,128]{1,0:T(1,128)}', space=vmem, size = 0x12000, scoped, tag = 'internal scratch']
  %s0 = inlined_call_operand.vmem [shape: f32[16,128], index: 0, kind: input, shape index: {}]
  %s1 = inlined_call_operand.vmem [shape: f32[128,64], index: 1, kind: input, shape index: {}]
  %s2 = inlined_call_operand.vmem [shape: f32[1,64], index: 2, kind: input, shape index: {}]
  %s3 = inlined_call_operand.vmem [shape: f32[64,128], index: 3, kind: input, shape index: {}]
  %s4 = inlined_call_operand.vmem [shape: f32[1,128], index: 4, kind: input, shape index: {}]
  %s5 = inlined_call_operand.hbm [shape: f32[16,128], index: 5, kind: output, shape index: {}]
  %s6 = sld [smem:[#allocation0]]
  $region30: #{tpu_custom_call.1} parent=0
    _
  %s8 = ssub.s32 1, %s6
  %s9 = scalar_select 0, %s8, %s6
  $region1: #{tpu_custom_call.1} parent=0
    #allocation2 [shape = 'u8[8192]{0}', space=vmem, size = 0x2000, scoped, tag = 'output window, operand 0, single buffered']
    #allocation3 [shape = 's32[1]{0}', space=sflag, size = 0x4, scoped, tag = 'scoped memory for tpu_custom_call.1']
    %10 = vsyncpa [#allocation3], 0
    // Predicated region
    $region2: #{tpu_custom_call.1} parent=1 // pred_check
      _
    $region3: #{tpu_custom_call.1} parent=1 // pred_check_branch
      %12 = sbr.rel (0) target = $region5
    $region4: #{tpu_custom_call.1} parent=1 // pred_region
      _
    $region5: #{tpu_custom_call.1} parent=1 // pred_fallthru
      _
    // Predicated region
    $region6: #{tpu_custom_call.1} parent=1 // pred_check
      _
    $region7: #{tpu_custom_call.1} parent=1 // pred_check_branch
      %14 = sbr.rel (0) target = $region9
    $region8: #{tpu_custom_call.1} parent=1 // pred_region
      _
    $region9: #{tpu_custom_call.1} parent=1 // pred_fallthru
      _
    // Predicated region
    $region10: #{tpu_custom_call.1} parent=1 // pred_check
      _
    $region11: #{tpu_custom_call.1} parent=1 // pred_check_branch
      %16 = sbr.rel (0) target = $region13
    $region12: #{tpu_custom_call.1} parent=1 // pred_region
      _
    $region13: #{tpu_custom_call.1} parent=1 // pred_fallthru
      _
    // Predicated region
    $region14: #{tpu_custom_call.1} parent=1 // pred_check
      _
    $region15: #{tpu_custom_call.1} parent=1 // pred_check_branch
      %18 = sbr.rel (0) target = $region17
    $region16: #{tpu_custom_call.1} parent=1 // pred_region
      _
    $region17: #{tpu_custom_call.1} parent=1 // pred_fallthru
      _
    // Predicated region
    $region18: #{tpu_custom_call.1} parent=1 // pred_check
      _
    $region19: #{tpu_custom_call.1} parent=1 // pred_check_branch
      %20 = sbr.rel (0) target = $region21
    $region20: #{tpu_custom_call.1} parent=1 // pred_region
      _
    $region21: #{tpu_custom_call.1} parent=1 // pred_fallthru
      _
    %v21 = vld [vmem:[%s0] sm:$0xff]
    %v22 = vld [vmem:[%s0 + $0x8] sm:$0xff]
    %v23 = vld [vmem:[%s1] sm:$0xff]
    %v24 = vld [vmem:[%s1 + $0x8] sm:$0xff]
    %v25 = vld [vmem:[%s1 + $0x10] sm:$0xff]
    %v26 = vld [vmem:[%s1 + $0x18] sm:$0xff]
    %v27 = vld [vmem:[%s1 + $0x20] sm:$0xff]
    %v28 = vld [vmem:[%s1 + $0x28] sm:$0xff]
    %v29 = vld [vmem:[%s1 + $0x30] sm:$0xff]
    %v30 = vld [vmem:[%s1 + $0x38] sm:$0xff]
    %v31 = vld [vmem:[%s1 + $0x40] sm:$0xff]
    %v32 = vld [vmem:[%s1 + $0x48] sm:$0xff]
    %v33 = vld [vmem:[%s1 + $0x50] sm:$0xff]
    %v34 = vld [vmem:[%s1 + $0x58] sm:$0xff]
    %v35 = vld [vmem:[%s1 + $0x60] sm:$0xff]
    %v36 = vld [vmem:[%s1 + $0x68] sm:$0xff]
    %v37 = vld [vmem:[%s1 + $0x70] sm:$0xff]
    %v38 = vld [vmem:[%s1 + $0x78] sm:$0xff]
    %v39 = vld [vmem:[%s2] sm:$0x1]
    %v41 = vlaneseq
    %v42 = vshrl.u32 %v41, 7
    %v43 = vsub.s32 0, %v42
    %v44 = vrot.slane %v39, %v43
    %46 = vmatprep.subr.mxu0 0.0
    %47 = vmatpush1.msra.mxu0 %v23
    %48 = vmatprep.subr.mxu0 0.0
    %49 = vmatpush1.msra.mxu0 %v24
    %50 = vmatprep.subr.mxu0 0.0
    %51 = vmatpush1.msra.mxu0 %v25
    %52 = vmatprep.subr.mxu0 0.0
    %53 = vmatpush1.msra.mxu0 %v26
    %54 = vmatprep.subr.mxu0 0.0
    %55 = vmatpush1.msra.mxu0 %v27
    %56 = vmatprep.subr.mxu0 0.0
    %57 = vmatpush1.msra.mxu0 %v28
    %58 = vmatprep.subr.mxu0 0.0
    %59 = vmatpush1.msra.mxu0 %v29
    %60 = vmatprep.subr.mxu0 0.0
    %61 = vmatpush1.msra.mxu0 %v30
    %62 = vmatprep.subr.mxu0 0.0
    %63 = vmatpush1.msra.mxu0 %v31
    %64 = vmatprep.subr.mxu0 0.0
    %65 = vmatpush1.msra.mxu0 %v32
    %66 = vmatprep.subr.mxu0 0.0
    %67 = vmatpush1.msra.mxu0 %v33
    %68 = vmatprep.subr.mxu0 0.0
    %69 = vmatpush1.msra.mxu0 %v34
    %70 = vmatprep.subr.mxu0 0.0
    %71 = vmatpush1.msra.mxu0 %v35
    %72 = vmatprep.subr.mxu0 0.0
    %73 = vmatpush1.msra.mxu0 %v36
    %74 = vmatprep.subr.mxu0 0.0
    %75 = vmatpush1.msra.mxu0 %v37
    %76 = vmatprep.subr.mxu0 0.0
    %77 = vmatpush1.msra.mxu0 %v38
    %78 = vmatprep.subr.mxu0 0.0
    %79 = vmatpush1.msra.mxu0 0.0
    %80 = vmatprep.subr.mxu0 0.0
    %81 = vmatpush1.msra.mxu0 0.0
    %82 = vmatprep.subr.mxu0 0.0
    %83 = vmatpush1.msra.mxu0 0.0
    %84 = vmatprep.subr.mxu0 0.0
    %85 = vmatpush1.msra.mxu0 0.0
    %86 = vmatprep.subr.mxu0 0.0
    %87 = vmatpush1.msra.mxu0 0.0
    %88 = vmatprep.subr.mxu0 0.0
    %89 = vmatpush1.msra.mxu0 0.0
    %90 = vmatprep.subr.mxu0 0.0
    %91 = vmatpush1.msra.mxu0 0.0
    %92 = vmatprep.subr.mxu0 0.0
    %93 = vmatpush1.msra.mxu0 0.0
    %94 = vmatprep.subr.mxu0 0.0
    %95 = vmatpush1.msra.mxu0 0.0
    %96 = vmatprep.subr.mxu0 0.0
    %97 = vmatpush1.msra.mxu0 0.0
    %98 = vmatprep.subr.mxu0 0.0
    %99 = vmatpush1.msra.mxu0 0.0
    %100 = vmatprep.subr.mxu0 0.0
    %101 = vmatpush1.msra.mxu0 0.0
    %102 = vmatprep.subr.mxu0 0.0
    %103 = vmatpush1.msra.mxu0 0.0
    %104 = vmatprep.subr.mxu0 0.0
    %105 = vmatpush1.msra.mxu0 0.0
    %106 = vmatprep.subr.mxu0 0.0
    %107 = vmatpush1.msra.mxu0 0.0
    %108 = vmatprep.subr.mxu0 0.0
    %109 = vmatpush1.msra.mxu0 0.0
    %110 = vmatprep.mubr.f32.mxu0 0.0
    %111 = vmatmul.mubr.f32.gmra.mrb[0].mxu0 %v21
    %v112 = vpop.f32.mrb[0].mxu0
    %v113 = vadd.f32 %v44, %v112
    %v114 = vpop.f32.mrb[0].mxu0
    %115 = vmatprep.mubr.f32.mxu0 0.0
    %116 = vmatmul.mubr.f32.gmra.mrb[0].mxu0 %v22
    %v117 = vpop.f32.mrb[0].mxu0
    %v118 = vadd.f32 %v44, %v117
    %v119 = vpop.f32.mrb[0].mxu0
    %120 = vdwg.mxu0
    %v121 = vmul.f32 %v113, 0.5
    %v122 = vmul.f32 %v118, 0.5
    %v123 = vmul.f32 %v113, 0.70710677
    %v124 = vmul.f32 %v118, 0.70710677
    %v125 = verf.f32.pop %v123
    %v126 = verf.f32.pop %v124
    %v127 = vadd.f32 %v125, 1.0
    %v128 = vadd.f32 %v126, 1.0
    %v129 = vmul.f32 %v121, %v127
    %v130 = vmul.f32 %v122, %v128
    %v131 = vld [vmem:[%s3] sm:$0xff]
    %v132 = vld [vmem:[%s3 + $0x8] sm:$0xff]
    %v133 = vld [vmem:[%s3 + $0x10] sm:$0xff]
    %v134 = vld [vmem:[%s3 + $0x18] sm:$0xff]
    %v135 = vld [vmem:[%s3 + $0x20] sm:$0xff]
    %v136 = vld [vmem:[%s3 + $0x28] sm:$0xff]
    %v137 = vld [vmem:[%s3 + $0x30] sm:$0xff]
    %v138 = vld [vmem:[%s3 + $0x38] sm:$0xff]
    %v139 = vld [vmem:[%s4] sm:$0x1]
    %v141 = vlaneseq
    %v142 = vshrl.u32 %v141, 7
    %v143 = vsub.s32 0, %v142
    %v144 = vrot.slane %v139, %v143
    %vm146 = vcmask 523264
    %v148 = vsel %vm146, %v129, 0
    %v151 = vsel %vm146, %v130, 0
    %153 = vmatprep.subr.mxu0 0.0
    %154 = vmatpush1.msra.mxu0 %v131
    %155 = vmatprep.subr.mxu0 0.0
    %156 = vmatpush1.msra.mxu0 %v132
    %157 = vmatprep.subr.mxu0 0.0
    %158 = vmatpush1.msra.mxu0 %v133
    %159 = vmatprep.subr.mxu0 0.0
    %160 = vmatpush1.msra.mxu0 %v134
    %161 = vmatprep.subr.mxu0 0.0
    %162 = vmatpush1.msra.mxu0 %v135
    %163 = vmatprep.subr.mxu0 0.0
    %164 = vmatpush1.msra.mxu0 %v136
    %165 = vmatprep.subr.mxu0 0.0
    %166 = vmatpush1.msra.mxu0 %v137
    %167 = vmatprep.subr.mxu0 0.0
    %168 = vmatpush1.msra.mxu0 %v138
    %169 = vmatprep.subr.mxu0 0.0
    %170 = vmatpush1.msra.mxu0 0.0
    %171 = vmatprep.subr.mxu0 0.0
    %172 = vmatpush1.msra.mxu0 0.0
    %173 = vmatprep.subr.mxu0 0.0
    %174 = vmatpush1.msra.mxu0 0.0
    %175 = vmatprep.subr.mxu0 0.0
    %176 = vmatpush1.msra.mxu0 0.0
    %177 = vmatprep.subr.mxu0 0.0
    %178 = vmatpush1.msra.mxu0 0.0
    %179 = vmatprep.subr.mxu0 0.0
    %180 = vmatpush1.msra.mxu0 0.0
    %181 = vmatprep.subr.mxu0 0.0
    %182 = vmatpush1.msra.mxu0 0.0
    %183 = vmatprep.subr.mxu0 0.0
    %184 = vmatpush1.msra.mxu0 0.0
    %185 = vmatprep.subr.mxu0 0.0
    %186 = vmatpush1.msra.mxu0 0.0
    %187 = vmatprep.subr.mxu0 0.0
    %188 = vmatpush1.msra.mxu0 0.0
    %189 = vmatprep.subr.mxu0 0.0
    %190 = vmatpush1.msra.mxu0 0.0
    %191 = vmatprep.subr.mxu0 0.0
    %192 = vmatpush1.msra.mxu0 0.0
    %193 = vmatprep.subr.mxu0 0.0
    %194 = vmatpush1.msra.mxu0 0.0
    %195 = vmatprep.subr.mxu0 0.0
    %196 = vmatpush1.msra.mxu0 0.0
    %197 = vmatprep.subr.mxu0 0.0
    %198 = vmatpush1.msra.mxu0 0.0
    %199 = vmatprep.subr.mxu0 0.0
    %200 = vmatpush1.msra.mxu0 0.0
    %201 = vmatprep.subr.mxu0 0.0
    %202 = vmatpush1.msra.mxu0 0.0
    %203 = vmatprep.subr.mxu0 0.0
    %204 = vmatpush1.msra.mxu0 0.0
    %205 = vmatprep.subr.mxu0 0.0
    %206 = vmatpush1.msra.mxu0 0.0
    %207 = vmatprep.subr.mxu0 0.0
    %208 = vmatpush1.msra.mxu0 0.0
    %209 = vmatprep.subr.mxu0 0.0
    %210 = vmatpush1.msra.mxu0 0.0
    %211 = vmatprep.subr.mxu0 0.0
    %212 = vmatpush1.msra.mxu0 0.0
    %213 = vmatprep.subr.mxu0 0.0
    %214 = vmatpush1.msra.mxu0 0.0
    %215 = vmatprep.subr.mxu0 0.0
    %216 = vmatpush1.msra.mxu0 0.0
    %217 = vmatprep.mubr.f32.mxu0 0.0
    %218 = vmatmul.mubr.f32.gmra.mrb[0].mxu0 %v148
    %v219 = vpop.f32.mrb[0].mxu0
    %v220 = vadd.f32 %v144, %v219
    %v221 = vpop.f32.mrb[0].mxu0
    %222 = vmatprep.mubr.f32.mxu0 0.0
    %223 = vmatmul.mubr.f32.gmra.mrb[0].mxu0 %v151
    %v224 = vpop.f32.mrb[0].mxu0
    %v225 = vadd.f32 %v144, %v224
    %v226 = vpop.f32.mrb[0].mxu0
    %227 = vdwg.mxu0
    %228 = vst [vmem:[#allocation2] sm:$0xff] %v220
    %229 = vst [vmem:[#allocation2 + $0x8] sm:$0xff] %v225
    // Predicated region
    $region22: #{tpu_custom_call.1} parent=1 // pred_check
      _
    $region23: #{tpu_custom_call.1} parent=1 // pred_check_branch
      %231 = sbr.rel (0) target = $region25
    $region24: #{tpu_custom_call.1} parent=1 // pred_region
      %s233 = ssub.s32 256, 256
      %234 = vsyncadd [#allocation3], %s233
      %s235 = sshll.u32 [#allocation2], 4
      %s236 = int_to_ptr.vmem [resolvable:$true] %s235
      %241 = dma.vmem_to_hbm [thread:$0]  %s236, 256, %s5, [#allocation3], 128, 128, 8
    $region25: #{tpu_custom_call.1} parent=1 // pred_fallthru
      _
    // Predicated region
    $region26: #{tpu_custom_call.1} parent=1 // pred_check
      _
    $region27: #{tpu_custom_call.1} parent=1 // pred_check_branch
      %243 = sbr.rel (0) target = $region29
    $region28: #{tpu_custom_call.1} parent=1 // pred_region
      %244 = dma.done [#allocation3], 256
    $region29: #{tpu_custom_call.1} parent=1 // pred_fallthru
      _
    %245 = vsyncpa [#allocation3], 1

// kernel: tpu_custom_call.1
$region0: #{tpu_custom_call.1}
  #allocation0 [shape = 'u32[]', space=smem, size = 0x4, offset = 0x4, fixed_abs, tag = 'smem constant byte address 0x4 - core index']
  #allocation1 [shape = 'u32[144,128]{1,0:T(1,128)}', space=vmem, size = 0x12000, scoped, tag = 'internal scratch']
  %s0 = inlined_call_operand.vmem [shape: f32[16,128], index: 0, kind: input, shape index: {}]
  %s1 = inlined_call_operand.vmem [shape: f32[128,64], index: 1, kind: input, shape index: {}]
  %s2 = inlined_call_operand.vmem [shape: f32[1,64], index: 2, kind: input, shape index: {}]
  %s3 = inlined_call_operand.vmem [shape: f32[64,128], index: 3, kind: input, shape index: {}]
  %s4 = inlined_call_operand.vmem [shape: f32[1,128], index: 4, kind: input, shape index: {}]
  %s5 = inlined_call_operand.hbm [shape: f32[16,128], index: 5, kind: output, shape index: {}]
  %s6 = sld [smem:[#allocation0]]
  $region30: #{tpu_custom_call.1} parent=0
    _
  %s8 = ssub.s32 1, %s6
  %s9 = scalar_select 0, %s8, %s6
  $region1: #{tpu_custom_call.1} parent=0
    #allocation2 [shape = 'u8[8192]{0}', space=vmem, size = 0x2000, scoped, tag = 'output window, operand 0, single buffered']
    #allocation3 [shape = 's32[1]{0}', space=sflag, size = 0x4, scoped, tag = 'scoped memory for tpu_custom_call.1']
    %10 = vsyncpa [#allocation3], 0
    // Predicated region
    $region2: #{tpu_custom_call.1} parent=1 // pred_check
      _
    $region3: #{tpu_custom_call.1} parent=1 // pred_check_branch
      %12 = sbr.rel (0) target = $region5
    $region4: #{tpu_custom_call.1} parent=1 // pred_region
      _
    $region5: #{tpu_custom_call.1} parent=1 // pred_fallthru
      _
    // Predicated region
    $region6: #{tpu_custom_call.1} parent=1 // pred_check
      _
    $region7: #{tpu_custom_call.1} parent=1 // pred_check_branch
      %14 = sbr.rel (0) target = $region9
    $region8: #{tpu_custom_call.1} parent=1 // pred_region
      _
    $region9: #{tpu_custom_call.1} parent=1 // pred_fallthru
      _
    // Predicated region
    $region10: #{tpu_custom_call.1} parent=1 // pred_check
      _
    $region11: #{tpu_custom_call.1} parent=1 // pred_check_branch
      %16 = sbr.rel (0) target = $region13
    $region12: #{tpu_custom_call.1} parent=1 // pred_region
      _
    $region13: #{tpu_custom_call.1} parent=1 // pred_fallthru
      _
    // Predicated region
    $region14: #{tpu_custom_call.1} parent=1 // pred_check
      _
    $region15: #{tpu_custom_call.1} parent=1 // pred_check_branch
      %18 = sbr.rel (0) target = $region17
    $region16: #{tpu_custom_call.1} parent=1 // pred_region
      _
    $region17: #{tpu_custom_call.1} parent=1 // pred_fallthru
      _
    // Predicated region
    $region18: #{tpu_custom_call.1} parent=1 // pred_check
      _
    $region19: #{tpu_custom_call.1} parent=1 // pred_check_branch
      %20 = sbr.rel (0) target = $region21
    $region20: #{tpu_custom_call.1} parent=1 // pred_region
      _
    $region21: #{tpu_custom_call.1} parent=1 // pred_fallthru
      _
    %v21 = vld [vmem:[%s0] sm:$0xff]
    %v22 = vld [vmem:[%s0 + $0x8] sm:$0xff]
    %v23 = vld [vmem:[%s1] sm:$0xff]
    %v24 = vld [vmem:[%s1 + $0x8] sm:$0xff]
    %v25 = vld [vmem:[%s1 + $0x10] sm:$0xff]
    %v26 = vld [vmem:[%s1 + $0x18] sm:$0xff]
    %v27 = vld [vmem:[%s1 + $0x20] sm:$0xff]
    %v28 = vld [vmem:[%s1 + $0x28] sm:$0xff]
    %v29 = vld [vmem:[%s1 + $0x30] sm:$0xff]
    %v30 = vld [vmem:[%s1 + $0x38] sm:$0xff]
    %v31 = vld [vmem:[%s1 + $0x40] sm:$0xff]
    %v32 = vld [vmem:[%s1 + $0x48] sm:$0xff]
    %v33 = vld [vmem:[%s1 + $0x50] sm:$0xff]
    %v34 = vld [vmem:[%s1 + $0x58] sm:$0xff]
    %v35 = vld [vmem:[%s1 + $0x60] sm:$0xff]
    %v36 = vld [vmem:[%s1 + $0x68] sm:$0xff]
    %v37 = vld [vmem:[%s1 + $0x70] sm:$0xff]
    %v38 = vld [vmem:[%s1 + $0x78] sm:$0xff]
    %v39 = vld [vmem:[%s2] sm:$0x1]
    %v41 = vlaneseq
    %v42 = vshrl.u32 %v41, 7
    %v43 = vsub.s32 0, %v42
    %v44 = vrot.slane %v39, %v43
    %46 = vmatprep.subr.mxu0 0.0
    %47 = vmatpush1.msra.mxu0 %v23
    %48 = vmatprep.subr.mxu0 0.0
    %49 = vmatpush1.msra.mxu0 %v24
    %50 = vmatprep.subr.mxu0 0.0
    %51 = vmatpush1.msra.mxu0 %v25
    %52 = vmatprep.subr.mxu0 0.0
    %53 = vmatpush1.msra.mxu0 %v26
    %54 = vmatprep.subr.mxu0 0.0
    %55 = vmatpush1.msra.mxu0 %v27
    %56 = vmatprep.subr.mxu0 0.0
    %57 = vmatpush1.msra.mxu0 %v28
    %58 = vmatprep.subr.mxu0 0.0
    %59 = vmatpush1.msra.mxu0 %v29
    %60 = vmatprep.subr.mxu0 0.0
    %61 = vmatpush1.msra.mxu0 %v30
    %62 = vmatprep.subr.mxu0 0.0
    %63 = vmatpush1.msra.mxu0 %v31
    %64 = vmatprep.subr.mxu0 0.0
    %65 = vmatpush1.msra.mxu0 %v32
    %66 = vmatprep.subr.mxu0 0.0
    %67 = vmatpush1.msra.mxu0 %v33
    %68 = vmatprep.subr.mxu0 0.0
    %69 = vmatpush1.msra.mxu0 %v34
    %70 = vmatprep.subr.mxu0 0.0
    %71 = vmatpush1.msra.mxu0 %v35
    %72 = vmatprep.subr.mxu0 0.0
    %73 = vmatpush1.msra.mxu0 %v36
    %74 = vmatprep.subr.mxu0 0.0
    %75 = vmatpush1.msra.mxu0 %v37
    %76 = vmatprep.subr.mxu0 0.0
    %77 = vmatpush1.msra.mxu0 %v38
    %78 = vmatprep.subr.mxu0 0.0
    %79 = vmatpush1.msra.mxu0 0.0
    %80 = vmatprep.subr.mxu0 0.0
    %81 = vmatpush1.msra.mxu0 0.0
    %82 = vmatprep.subr.mxu0 0.0
    %83 = vmatpush1.msra.mxu0 0.0
    %84 = vmatprep.subr.mxu0 0.0
    %85 = vmatpush1.msra.mxu0 0.0
    %86 = vmatprep.subr.mxu0 0.0
    %87 = vmatpush1.msra.mxu0 0.0
    %88 = vmatprep.subr.mxu0 0.0
    %89 = vmatpush1.msra.mxu0 0.0
    %90 = vmatprep.subr.mxu0 0.0
    %91 = vmatpush1.msra.mxu0 0.0
    %92 = vmatprep.subr.mxu0 0.0
    %93 = vmatpush1.msra.mxu0 0.0
    %94 = vmatprep.subr.mxu0 0.0
    %95 = vmatpush1.msra.mxu0 0.0
    %96 = vmatprep.subr.mxu0 0.0
    %97 = vmatpush1.msra.mxu0 0.0
    %98 = vmatprep.subr.mxu0 0.0
    %99 = vmatpush1.msra.mxu0 0.0
    %100 = vmatprep.subr.mxu0 0.0
    %101 = vmatpush1.msra.mxu0 0.0
    %102 = vmatprep.subr.mxu0 0.0
    %103 = vmatpush1.msra.mxu0 0.0
    %104 = vmatprep.subr.mxu0 0.0
    %105 = vmatpush1.msra.mxu0 0.0
    %106 = vmatprep.subr.mxu0 0.0
    %107 = vmatpush1.msra.mxu0 0.0
    %108 = vmatprep.subr.mxu0 0.0
    %109 = vmatpush1.msra.mxu0 0.0
    %110 = vmatprep.mubr.f32.mxu0 0.0
    %111 = vmatmul.mubr.f32.gmra.mrb[0].mxu0 %v21
    %v112 = vpop.f32.mrb[0].mxu0
    %v113 = vadd.f32 %v44, %v112
    %v114 = vpop.f32.mrb[0].mxu0
    %115 = vmatprep.mubr.f32.mxu0 0.0
    %116 = vmatmul.mubr.f32.gmra.mrb[0].mxu0 %v22
    %v117 = vpop.f32.mrb[0].mxu0
    %v118 = vadd.f32 %v44, %v117
    %v119 = vpop.f32.mrb[0].mxu0
    %120 = vdwg.mxu0
    %v121 = vmul.f32 %v113, 0.5
    %v122 = vmul.f32 %v118, 0.5
    %v123 = vmul.f32 %v113, 0.70710677
    %v124 = vmul.f32 %v118, 0.70710677
    %v125 = verf.f32.pop %v123
    %v126 = verf.f32.pop %v124
    %v127 = vadd.f32 %v125, 1.0
    %v128 = vadd.f32 %v126, 1.0
    %v129 = vmul.f32 %v121, %v127
    %v130 = vmul.f32 %v122, %v128
    %v131 = vld [vmem:[%s3] sm:$0xff]
    %v132 = vld [vmem:[%s3 + $0x8] sm:$0xff]
    %v133 = vld [vmem:[%s3 + $0x10] sm:$0xff]
    %v134 = vld [vmem:[%s3 + $0x18] sm:$0xff]
    %v135 = vld [vmem:[%s3 + $0x20] sm:$0xff]
    %v136 = vld [vmem:[%s3 + $0x28] sm:$0xff]
    %v137 = vld [vmem:[%s3 + $0x30] sm:$0xff]
    %v138 = vld [vmem:[%s3 + $0x38] sm:$0xff]
    %v139 = vld [vmem:[%s4] sm:$0x1]
    %v141 = vlaneseq
    %v142 = vshrl.u32 %v141, 7
    %v143 = vsub.s32 0, %v142
    %v144 = vrot.slane %v139, %v143
    %vm146 = vcmask 523264
    %v148 = vsel %vm146, %v129, 0
    %v151 = vsel %vm146, %v130, 0
    %153 = vmatprep.subr.mxu0 0.0
    %154 = vmatpush1.msra.mxu0 %v131
    %155 = vmatprep.subr.mxu0 0.0
    %156 = vmatpush1.msra.mxu0 %v132
    %157 = vmatprep.subr.mxu0 0.0
    %158 = vmatpush1.msra.mxu0 %v133
    %159 = vmatprep.subr.mxu0 0.0
    %160 = vmatpush1.msra.mxu0 %v134
    %161 = vmatprep.subr.mxu0 0.0
    %162 = vmatpush1.msra.mxu0 %v135
    %163 = vmatprep.subr.mxu0 0.0
    %164 = vmatpush1.msra.mxu0 %v136
    %165 = vmatprep.subr.mxu0 0.0
    %166 = vmatpush1.msra.mxu0 %v137
    %167 = vmatprep.subr.mxu0 0.0
    %168 = vmatpush1.msra.mxu0 %v138
    %169 = vmatprep.subr.mxu0 0.0
    %170 = vmatpush1.msra.mxu0 0.0
    %171 = vmatprep.subr.mxu0 0.0
    %172 = vmatpush1.msra.mxu0 0.0
    %173 = vmatprep.subr.mxu0 0.0
    %174 = vmatpush1.msra.mxu0 0.0
    %175 = vmatprep.subr.mxu0 0.0
    %176 = vmatpush1.msra.mxu0 0.0
    %177 = vmatprep.subr.mxu0 0.0
    %178 = vmatpush1.msra.mxu0 0.0
    %179 = vmatprep.subr.mxu0 0.0
    %180 = vmatpush1.msra.mxu0 0.0
    %181 = vmatprep.subr.mxu0 0.0
    %182 = vmatpush1.msra.mxu0 0.0
    %183 = vmatprep.subr.mxu0 0.0
    %184 = vmatpush1.msra.mxu0 0.0
    %185 = vmatprep.subr.mxu0 0.0
    %186 = vmatpush1.msra.mxu0 0.0
    %187 = vmatprep.subr.mxu0 0.0
    %188 = vmatpush1.msra.mxu0 0.0
    %189 = vmatprep.subr.mxu0 0.0
    %190 = vmatpush1.msra.mxu0 0.0
    %191 = vmatprep.subr.mxu0 0.0
    %192 = vmatpush1.msra.mxu0 0.0
    %193 = vmatprep.subr.mxu0 0.0
    %194 = vmatpush1.msra.mxu0 0.0
    %195 = vmatprep.subr.mxu0 0.0
    %196 = vmatpush1.msra.mxu0 0.0
    %197 = vmatprep.subr.mxu0 0.0
    %198 = vmatpush1.msra.mxu0 0.0
    %199 = vmatprep.subr.mxu0 0.0
    %200 = vmatpush1.msra.mxu0 0.0
    %201 = vmatprep.subr.mxu0 0.0
    %202 = vmatpush1.msra.mxu0 0.0
    %203 = vmatprep.subr.mxu0 0.0
    %204 = vmatpush1.msra.mxu0 0.0
    %205 = vmatprep.subr.mxu0 0.0
    %206 = vmatpush1.msra.mxu0 0.0
    %207 = vmatprep.subr.mxu0 0.0
    %208 = vmatpush1.msra.mxu0 0.0
    %209 = vmatprep.subr.mxu0 0.0
    %210 = vmatpush1.msra.mxu0 0.0
    %211 = vmatprep.subr.mxu0 0.0
    %212 = vmatpush1.msra.mxu0 0.0
    %213 = vmatprep.subr.mxu0 0.0
    %214 = vmatpush1.msra.mxu0 0.0
    %215 = vmatprep.subr.mxu0 0.0
    %216 = vmatpush1.msra.mxu0 0.0
    %217 = vmatprep.mubr.f32.mxu0 0.0
    %218 = vmatmul.mubr.f32.gmra.mrb[0].mxu0 %v148
    %v219 = vpop.f32.mrb[0].mxu0
    %v220 = vadd.f32 %v144, %v219
    %v221 = vpop.f32.mrb[0].mxu0
    %222 = vmatprep.mubr.f32.mxu0 0.0
    %223 = vmatmul.mubr.f32.gmra.mrb[0].mxu0 %v151
    %v224 = vpop.f32.mrb[0].mxu0
    %v225 = vadd.f32 %v144, %v224
    %v226 = vpop.f32.mrb[0].mxu0
    %227 = vdwg.mxu0
    %228 = vst [vmem:[#allocation2] sm:$0xff] %v220
    %229 = vst [vmem:[#allocation2 + $0x8] sm:$0xff] %v225
    // Predicated region
    $region22: #{tpu_custom_call.1} parent=1 // pred_check
      _
    $region23: #{tpu_custom_call.1} parent=1 // pred_check_branch
      %231 = sbr.rel (0) target = $region25
    $region24: #{tpu_custom_call.1} parent=1 // pred_region
      %s233 = ssub.s32 256, 256
      %234 = vsyncadd [#allocation3], %s233
      %s235 = sshll.u32 [#allocation2], 4
      %s236 = int_to_ptr.vmem [resolvable:$true] %s235
      %241 = dma.vmem_to_hbm [thread:$0]  %s236, 256, %s5, [#allocation3], 128, 128, 8
    $region25: #{tpu_custom_call.1} parent=1 // pred_fallthru
      _
    // Predicated region
    $region26: #{tpu_custom_call.1} parent=1 // pred_check
      _
    $region27: #{tpu_custom_call.1} parent=1 // pred_check_branch
      %243 = sbr.rel (0) target = $region29
    $region28: #{tpu_custom_call.1} parent=1 // pred_region
      %244 = dma.done [#allocation3], 256
    $region29: #{tpu_custom_call.1} parent=1 // pred_fallthru
      _
    %245 = vsyncpa [#allocation3], 1

</llo_original>
